<compile_context>
chip_gen: v7x
topology: tpu7x:2x2x1
jax: 0.10.0
libtpu: 0.0.40
codegen_flags: <defaults>
</compile_context>

<pallas_src>
import math
import functools

import jax
import jax.numpy as jnp
from jax.experimental import pallas as pl
from jax.experimental.pallas import tpu as pltpu


def make_positional_encoding_table(max_len, d_model, dtype=jnp.float32):
    """Replicates the buffer built in PositionalEncoding.__init__ -> (max_len, 1, d_model)."""
    position = jnp.arange(0, max_len, dtype=jnp.float32)[:, None]            # (max_len, 1)
    div_term = jnp.exp(
        jnp.arange(0, d_model, 2, dtype=jnp.float32) * (-math.log(10000.0) / d_model)
    )                                                                         # (d_model//2,)
    pe = jnp.zeros((max_len, d_model), dtype=jnp.float32)
    pe = pe.at[:, 0::2].set(jnp.sin(position * div_term))
    pe = pe.at[:, 1::2].set(jnp.cos(position * div_term))
    # pe.unsqueeze(0).transpose(0, 1) -> (max_len, 1, d_model)
    return pe[:, None, :].astype(dtype)


def _pe_add_kernel(x_ref, pe_ref, o_ref, *, batch):
    # x_ref / o_ref: (bs, B*D)   pe_ref: (bs, D)
    # Broadcast the positional row across the batch inside the kernel (lane-axis
    # tile), so only (bs, D) of PE traffic hits HBM per tile.
    pe_full = jnp.tile(pe_ref[...], (1, batch))                 # (bs, B*D)
    o_ref[...] = x_ref[...] + pe_full


def _pe_add_dropout_kernel(x_ref, pe_ref, bits_ref, o_ref, *, batch, threshold, scale):
    # x_ref / bits_ref / o_ref: (bs, B*D)   pe_ref: (bs, D)
    pe_full = jnp.tile(pe_ref[...], (1, batch))                 # (bs, B*D)
    y = x_ref[...] + pe_full
    # Inverted dropout via integer threshold: keep iff bits >= round(p * 2^32).
    keep = bits_ref[...] >= jnp.uint32(threshold)
    o_ref[...] = jnp.where(keep, y * jnp.asarray(scale, y.dtype), jnp.zeros_like(y))


def _choose_block_seq(S, row_bytes, *, target_tile_bytes=1 << 20, min_steps=8):
    """Rows per tile: ~1 MiB x-tile, multiple of 8, >= min_steps grid steps if S allows."""
    if S <= 8:
        return S
    by_bytes = max(1, target_tile_bytes // max(row_bytes, 1))
    by_steps = max(1, S // min_steps)
    bs = (min(S, by_bytes, by_steps) // 8) * 8
    return max(8, min(bs, S))


def positional_encoding_forward(x, pe, *, p=0.1, training=True, rng_key=None,
                                block_seq=None, donate_x=False):
    """Pallas forward of PositionalEncoding: dropout(x + pe[:S]).

    x:  (S, B, D) sequence-first, as in the PyTorch module.
    pe: (max_len, 1, D) buffer from make_positional_encoding_table.
    """
    if not (0.0 <= p < 1.0):
        raise ValueError(f"dropout p must be in [0, 1), got {p}")
    S, B, D = x.shape
    max_len = pe.shape[0]
    if S > max_len:
        raise ValueError("sequence length exceeds max_len of the positional table")

    # Lane-dense 2-D views (free bitcast reshapes of contiguous arrays).
    x2 = x.reshape(S, B * D)
    pe2 = pe.reshape(max_len, D).astype(x.dtype)     # full table, indexed via BlockSpec

    itemsize = jnp.dtype(x.dtype).itemsize
    bs = block_seq if block_seq is not None else _choose_block_seq(S, B * D * itemsize)
    bs = min(bs, S)
    if bs < S and bs % 8 != 0:
        raise ValueError("block_seq must be a multiple of 8 (or cover the whole sequence)")
    grid = (pl.cdiv(S, bs),)

    # If a single block covers a non-multiple-of-8 sequence, the PE block's
    # leading dim must equal its array's leading dim -> slice only in that
    # corner case; otherwise pass the full buffer (no HBM->HBM slice copy).
    if bs % 8 != 0 and S != max_len:
        pe2 = pe2[:S]

    x_spec = pl.BlockSpec((bs, B * D), lambda i: (i, 0))
    pe_spec = pl.BlockSpec((bs, D), lambda i: (i, 0))
    out_spec = pl.BlockSpec((bs, B * D), lambda i: (i, 0))

    apply_dropout = training and p > 0.0
    if apply_dropout:
        # TODO(synk): on real TPU hardware the extra HBM read of `bits` could be
        # removed by using the on-chip PRNG (pltpu.prng_seed/prng_random_bits),
        # but those primitives do not lower under interpret/CPU execution.
        if rng_key is None:
            rng_key = jax.random.PRNGKey(0)
        bits = jax.random.bits(rng_key, (S, B * D), dtype=jnp.uint32)
        threshold = min(int(round(p * 4294967296.0)), 4294967295)
        kernel = functools.partial(
            _pe_add_dropout_kernel, batch=B, threshold=threshold, scale=1.0 / (1.0 - p))
        in_specs = [x_spec, pe_spec, pl.BlockSpec((bs, B * D), lambda i: (i, 0))]
        operands = (x2, pe2, bits)
    else:
        kernel = functools.partial(_pe_add_kernel, batch=B)
        in_specs = [x_spec, pe_spec]
        operands = (x2, pe2)

    out2 = pl.pallas_call(
        kernel,
        out_shape=jax.ShapeDtypeStruct((S, B * D), x.dtype),
        grid=grid,
        in_specs=in_specs,
        out_specs=out_spec,
        # x can be aliased onto the output (same shape/dtype) when the caller
        # no longer needs it; off by default so x stays valid after the call.
        input_output_aliases={0: 0} if donate_x else {},
        compiler_params=pltpu.CompilerParams(
            dimension_semantics=("parallel",),
        ),
    )(*operands)
    return out2.reshape(S, B, D)


if __name__ == "__main__":
    d_model = 32
    max_len = 64          # module default is 5000; small table for the demo
    seq_len = 8
    batch = 2
    dropout_p = 0.1

    key = jax.random.PRNGKey(0)
    x = jax.random.normal(key, (seq_len, batch, d_model), dtype=jnp.float32)
    pe = make_positional_encoding_table(max_len, d_model)

    ref = x + pe[:seq_len]

    # Eval mode: dropout is identity -> specialized add-only kernel, exact match.
    out_eval = positional_encoding_forward(x, pe, p=dropout_p, training=False)
    out_eval = jax.block_until_ready(out_eval)
    assert out_eval.shape == (seq_len, batch, d_model)
    assert jnp.allclose(out_eval, ref, atol=1e-6, rtol=1e-6), "eval-mode mismatch"

    # Training mode: inverted dropout, deterministic given the rng_key.
    out_train = positional_encoding_forward(
        x, pe, p=dropout_p, training=True, rng_key=jax.random.PRNGKey(1))
    out_train = jax.block_until_ready(out_train)
    assert out_train.shape == (seq_len, batch, d_model)
    # Kept elements equal ref / (1-p); dropped elements are 0.
    kept = out_train != 0.0
    assert jnp.allclose(
        jnp.where(kept, out_train, 0.0),
        jnp.where(kept, ref / (1.0 - dropout_p), 0.0),
        atol=1e-5, rtol=1e-5,
    ), "training-mode dropout scaling mismatch"

    print("KERNEL_OK")
</pallas_src>

<mosaic_0001>
module attributes {stable_mosaic.version = 11 : i64} {
  func.func @_pe_add_kernel(%arg0: i32, %arg1: memref<8x64xf32, #tpu.memory_space<vmem>>, %arg2: memref<8x32xf32, #tpu.memory_space<vmem>>, %arg3: memref<8x64xf32, #tpu.memory_space<vmem>>) attributes {dimension_semantics = [#tpu.dimension_semantics<parallel>], iteration_bounds = array<i64: 1>, scalar_prefetch = 0 : i64, scratch_operands = 0 : i64, tpu.core_type = #tpu.core_type<tc>, window_params = [{transform_indices = @transform_0, window_bounds = array<i64: 8, 64>}, {transform_indices = @transform_1, window_bounds = array<i64: 8, 32>}, {transform_indices = @transform_2, window_bounds = array<i64: 8, 64>}]} {
    %c0 = arith.constant 0 : index
    %c0_0 = arith.constant 0 : index
    %0 = vector.load %arg2[%c0, %c0_0] : memref<8x32xf32, #tpu.memory_space<vmem>>, vector<8x32xf32>
    %1 = tpu.concatenate %0, %0 in 1 : vector<8x32xf32>, vector<8x32xf32> -> vector<8x64xf32>
    %c0_1 = arith.constant 0 : index
    %c0_2 = arith.constant 0 : index
    %2 = vector.load %arg1[%c0_1, %c0_2] : memref<8x64xf32, #tpu.memory_space<vmem>>, vector<8x64xf32>
    %3 = arith.addf %2, %1 : vector<8x64xf32>
    %c0_3 = arith.constant 0 : index
    %c0_4 = arith.constant 0 : index
    %4 = vector.load %arg3[%c0_3, %c0_4] : memref<8x64xf32, #tpu.memory_space<vmem>>, vector<8x64xf32>
    tpu.vector_store %arg3[%c0_3, %c0_4], %3 {strides = array<i32>} : memref<8x64xf32, #tpu.memory_space<vmem>>, vector<8x64xf32>,
    return
  }
  func.func @transform_0(%arg0: i32) -> (i32, i32) {
    %c0_i32 = arith.constant 0 : i32
    %c0_i32_0 = arith.constant 0 : i32
    return %arg0, %c0_i32 : i32, i32
  }
  func.func @transform_1(%arg0: i32) -> (i32, i32) {
    %c0_i32 = arith.constant 0 : i32
    %c0_i32_0 = arith.constant 0 : i32
    return %arg0, %c0_i32 : i32, i32
  }
  func.func @transform_2(%arg0: i32) -> (i32, i32) {
    %c0_i32 = arith.constant 0 : i32
    %c0_i32_0 = arith.constant 0 : i32
    return %arg0, %c0_i32 : i32, i32
  }
}

</mosaic_0001>

<llo_original>
// kernel: tpu_custom_call.1
$region0: #{tpu_custom_call.1}
  #allocation0 [shape = 'u32[]', space=smem, size = 0x4, offset = 0x4, fixed_abs, tag = 'smem constant byte address 0x4 - core index']
  #allocation1 [shape = 'u32[144,128]{1,0:T(1,128)}', space=vmem, size = 0x12000, scoped, tag = 'internal scratch']
  %s0 = inlined_call_operand.vmem [shape: f32[8,64], index: 0, kind: input, shape index: {}]
  %s1 = inlined_call_operand.vmem [shape: f32[64,32], index: 1, kind: input, shape index: {}]
  %s2 = inlined_call_operand.hbm [shape: f32[8,64], index: 2, kind: output, shape index: {}]
  %s3 = sld [smem:[#allocation0]]
  $region18: #{tpu_custom_call.1} parent=0
    _
  %s5 = ssub.s32 1, %s3
  %s6 = scalar_select 0, %s5, %s3
  $region1: #{tpu_custom_call.1} parent=0
    #allocation2 [shape = 'u8[4096]{0}', space=vmem, size = 0x1000, scoped, tag = 'output window, operand 0, single buffered']
    #allocation3 [shape = 's32[1]{0}', space=sflag, size = 0x4, scoped, tag = 'scoped memory for tpu_custom_call.1']
    %7 = vsyncpa [#allocation3], 0
    // Predicated region
    $region2: #{tpu_custom_call.1} parent=1 // pred_check
      _
    $region3: #{tpu_custom_call.1} parent=1 // pred_check_branch
      %9 = sbr.rel (0) target = $region5
    $region4: #{tpu_custom_call.1} parent=1 // pred_region
      _
    $region5: #{tpu_custom_call.1} parent=1 // pred_fallthru
      _
    // Predicated region
    $region6: #{tpu_custom_call.1} parent=1 // pred_check
      _
    $region7: #{tpu_custom_call.1} parent=1 // pred_check_branch
      %11 = sbr.rel (0) target = $region9
    $region8: #{tpu_custom_call.1} parent=1 // pred_region
      _
    $region9: #{tpu_custom_call.1} parent=1 // pred_fallthru
      _
    %v12 = vld [vmem:[%s1] sm:$0xff]
    %14 = vrot.lane.b32.xlu0 %v12, 32
    %v15 = vpop.permute.xlu0 %14
    %vm17 = vcmask 261120
    %v18 = vsel %vm17, %v12, %v15
    %v19 = vld [vmem:[%s0] sm:$0xff]
    %v20 = vadd.f32 %v19, %v18
    %vm21 = vcmask 523264
    %22 = vst.msk [vmem:[#allocation2] sm:$0xff] %vm21, %v20
    // Predicated region
    $region10: #{tpu_custom_call.1} parent=1 // pred_check
      _
    $region11: #{tpu_custom_call.1} parent=1 // pred_check_branch
      %24 = sbr.rel (0) target = $region13
    $region12: #{tpu_custom_call.1} parent=1 // pred_region
      %s26 = ssub.s32 128, 128
      %27 = vsyncadd [#allocation3], %s26
      %s29 = sshll.u32 [#allocation2], 4
      %s30 = int_to_ptr.vmem [resolvable:$true] %s29
      %32 = dma.vmem_to_hbm [thread:$0]  %s30, 128, %s2, [#allocation3]
    $region13: #{tpu_custom_call.1} parent=1 // pred_fallthru
      _
    // Predicated region
    $region14: #{tpu_custom_call.1} parent=1 // pred_check
      _
    $region15: #{tpu_custom_call.1} parent=1 // pred_check_branch
      %34 = sbr.rel (0) target = $region17
    $region16: #{tpu_custom_call.1} parent=1 // pred_region
      %35 = dma.done [#allocation3], 128
    $region17: #{tpu_custom_call.1} parent=1 // pred_fallthru
      _
    %36 = vsyncpa [#allocation3], 1

</llo_original>
